<compile_context>
chip_gen: v6e
topology: v6e:2x2x1
jax: 0.10.0
libtpu: 0.0.40
codegen_flags: <defaults>
</compile_context>

<pallas_src>
import functools
import math

import jax
import jax.numpy as jnp
from jax.experimental import pallas as pl
from jax.experimental.pallas import tpu as pltpu


def _round_up(x, m):
    return ((x + m - 1) // m) * m


def _classifier_kernel(x_ref,
                       w1_ref, b1_ref,
                       w2_ref, b2_ref,
                       w3_ref, b3_ref,
                       w4_ref, b4_ref,
                       o_ref, *, n_classes, bf16_compute):
    """Fused 4-layer MLP + log_softmax for one batch tile.

    Matmuls accumulate in f32 via preferred_element_type; bias adds, ReLU and
    the softmax run in f32.  The classifier-head weights/bias are lane-padded
    to a multiple of 128 (zeros / -1e30) so the softmax reduction covers a full
    vreg; only the real `n_classes` lanes are stored back.
    """
    x = x_ref[...]
    h = jnp.dot(x, w1_ref[...], preferred_element_type=jnp.float32) + b1_ref[...]
    h = jnp.maximum(h, 0.0)

    def linear(a, w_ref, b_ref):
        if bf16_compute:
            a = a.astype(jnp.bfloat16)      # weights already bf16 from wrapper
        return jnp.dot(a, w_ref[...], preferred_element_type=jnp.float32) + b_ref[...]

    h = jnp.maximum(linear(h, w2_ref, b2_ref), 0.0)
    h = jnp.maximum(linear(h, w3_ref, b3_ref), 0.0)
    logits = linear(h, w4_ref, b4_ref)      # (bb, C_pad); padded cols ~ -1e30

    # Numerically stable log_softmax along the last axis (padded cols vanish).
    m = jnp.max(logits, axis=-1, keepdims=True)
    z = logits - m
    lse = jnp.log(jnp.sum(jnp.exp(z), axis=-1, keepdims=True))
    o_ref[...] = (z - lse)[:, :n_classes].astype(o_ref.dtype)


@functools.partial(
    jax.jit, static_argnames=("block_b", "bf16_compute", "vmem_budget_bytes"))
def classifier_forward(features, params, *, block_b=2048, bf16_compute=None,
                       vmem_budget_bytes=24 << 20):
    """features: (B, H), f32 or bf16.  Pass bf16 features from the producer to
    halve the dominant HBM read -- the wrapper never casts the feature matrix.
    params: dict of transposed f32 weights (in, out) and biases (1, out).
    """
    B, H = features.shape
    C = params["w4"].shape[1]
    if bf16_compute is None:
        # Matmuls only become compute-visible at larger H; small problems stay
        # exact f32 (they are HBM / per-step-overhead bound anyway).
        bf16_compute = H >= 512

    x = features
    in_itemsize = x.dtype.itemsize
    feat_bf16 = x.dtype == jnp.bfloat16

    # ---- weight prep (tiny vs. the feature stream; could be pre-packed once) ----
    w1, b1 = params["w1"], params["b1"]
    w2, b2 = params["w2"], params["b2"]
    w3, b3 = params["w3"], params["b3"]
    if feat_bf16:
        w1 = w1.astype(jnp.bfloat16)        # native bf16 MXU path for layer 1
    if bf16_compute:
        w2 = w2.astype(jnp.bfloat16)
        w3 = w3.astype(jnp.bfloat16)

    # Lane-pad the classifier head: padded columns have zero weights and -1e30
    # bias so they vanish under the softmax.  Only the real C columns are ever
    # written back to HBM.
    C_pad = _round_up(max(C, 128), 128)
    w4p = jnp.zeros((H // 4, C_pad), jnp.float32).at[:, :C].set(params["w4"])
    b4p = jnp.full((1, C_pad), -1e30, jnp.float32).at[:, :C].set(params["b4"])
    if bf16_compute:
        w4p = w4p.astype(jnp.bfloat16)

    # ---- batch tile selection ---------------------------------------------
    sub = 16 if in_itemsize == 2 else 8     # sublane packing granularity
    # Force >=2 grid steps when the batch allows, so ("parallel",) can shard
    # tiles across both TensorCores on v7x (no-op on v5e/v6e).
    bb = min(block_b, _round_up(max(pl.cdiv(B, 2), 1), sub))
    bb = max(sub, _round_up(bb, sub))

    # Clamp the tile to an explicit VMEM budget.  Constant-index weight blocks
    # are never re-DMA'd, but the pipeliner may still allocate two buffers for
    # them -> charge resident weights at 2x so big-H configs don't OOM on v7x.
    w_bytes = sum(int(a.size) * a.dtype.itemsize
                  for a in (w1, b1, w2, b2, w3, b3, w4p, b4p))
    resident_bytes = 2 * w_bytes
    per_row = (2 * H * in_itemsize          # input tile, double-buffered
               + 2 * C * 4                  # output tile, double-buffered
               + 4 * (2 * H + C_pad))       # f32 activation / logits temporaries
    avail = max(vmem_budget_bytes - resident_bytes, sub * per_row)
    bb_cap = max(sub, (avail // per_row) // sub * sub)
    bb = min(bb, bb_cap)

    grid = (pl.cdiv(B, bb),)

    vmem_needed = resident_bytes + bb * per_row + (4 << 20)   # + compiler slack
    vmem_limit = int(min(max(vmem_needed, 32 << 20), 60 << 20))

    def whole(shape):
        # Whole-array, constant-index block: stays VMEM-resident across the
        # batch grid (no re-DMA per step).
        return pl.BlockSpec(shape, lambda *_, _s=shape: (0,) * len(_s))

    # Advisory cost estimate (in-kernel traffic only) for XLA's scheduler.
    flops = 2 * B * (H * H + H * (H // 2) + (H // 2) * (H // 4) + (H // 4) * C_pad)
    cost = pl.CostEstimate(
        flops=int(flops),
        transcendentals=int(B * C_pad),
        bytes_accessed=int(B * H * in_itemsize + B * C * 4 + w_bytes))

    kernel = functools.partial(
        _classifier_kernel, n_classes=C, bf16_compute=bf16_compute)

    return pl.pallas_call(
        kernel,
        out_shape=jax.ShapeDtypeStruct((B, C), jnp.float32),
        grid=grid,
        in_specs=[
            pl.BlockSpec((bb, H), lambda i: (i, 0)),   # features, batch-tiled (ragged tail OK)
            whole(w1.shape), whole(b1.shape),          # weights stay resident in VMEM
            whole(w2.shape), whole(b2.shape),
            whole(w3.shape), whole(b3.shape),
            whole(w4p.shape), whole(b4p.shape),
        ],
        # Narrow store: only the real C classes go back to HBM.  C equals the
        # full last dim of the output array, so the block shape is legal.
        out_specs=pl.BlockSpec((bb, C), lambda i: (i, 0)),
        compiler_params=pltpu.CompilerParams(
            dimension_semantics=("parallel",),
            vmem_limit_bytes=vmem_limit),
        cost_estimate=cost,
    )(x, w1, b1, w2, b2, w3, b3, w4p, b4p)


def init_classifier_params(key, n_hidden, n_classes):
    """torch.nn.Linear-style init: U(-1/sqrt(fan_in), +1/sqrt(fan_in)).

    Weights stored as (in_features, out_features); biases as (1, out_features).
    """
    dims = [
        (n_hidden, n_hidden),
        (n_hidden, n_hidden // 2),
        (n_hidden // 2, n_hidden // 4),
        (n_hidden // 4, n_classes),
    ]
    params = {}
    for idx, (fan_in, fan_out) in enumerate(dims, start=1):
        key, kw, kb = jax.random.split(key, 3)
        bound = 1.0 / math.sqrt(fan_in)
        params[f"w{idx}"] = jax.random.uniform(
            kw, (fan_in, fan_out), jnp.float32, minval=-bound, maxval=bound)
        params[f"b{idx}"] = jax.random.uniform(
            kb, (1, fan_out), jnp.float32, minval=-bound, maxval=bound)
    return params


def _reference_forward(features, params):
    h = features.astype(jnp.float32)
    h = jnp.maximum(h @ params["w1"] + params["b1"], 0.0)
    h = jnp.maximum(h @ params["w2"] + params["b2"], 0.0)
    h = jnp.maximum(h @ params["w3"] + params["b3"], 0.0)
    logits = h @ params["w4"] + params["b4"]
    return jax.nn.log_softmax(logits, axis=-1)


if __name__ == "__main__":
    key = jax.random.PRNGKey(0)

    # --- Test 1: small shapes, f32 end-to-end, ragged batch (exact check) ----
    n_hidden, n_classes, batch = 32, 4, 10   # batch not a multiple of 8 -> ragged last tile
    key, k_feat, k_params = jax.random.split(key, 3)
    features = jax.random.normal(k_feat, (batch, n_hidden), jnp.float32)
    params = init_classifier_params(k_params, n_hidden, n_classes)

    ref = _reference_forward(features, params)
    out = jax.block_until_ready(classifier_forward(features, params))
    assert out.shape == (batch, n_classes)
    assert jnp.allclose(out, ref, atol=1e-5, rtol=1e-5), "f32 mismatch vs reference"

    # --- Test 2: caller-provided bf16 features (bandwidth path) --------------
    out_bf16 = jax.block_until_ready(
        classifier_forward(features.astype(jnp.bfloat16), params))
    assert out_bf16.shape == (batch, n_classes)
    assert jnp.allclose(out_bf16, ref, atol=5e-2, rtol=5e-2), "bf16-feature mismatch"

    # --- Test 3: larger hidden size -> bf16 MXU operands for layers 2-4 ------
    n_hidden2, n_classes2, batch2 = 512, 7, 300
    key, k_feat2, k_params2 = jax.random.split(key, 3)
    features2 = jax.random.normal(k_feat2, (batch2, n_hidden2), jnp.float32)
    params2 = init_classifier_params(k_params2, n_hidden2, n_classes2)

    ref2 = _reference_forward(features2, params2)
    out2 = jax.block_until_ready(classifier_forward(features2, params2))
    assert out2.shape == (batch2, n_classes2)
    assert jnp.allclose(out2, ref2, atol=1e-1, rtol=1e-1), "bf16-compute mismatch"

    print("KERNEL_OK")
</pallas_src>

<mosaic_0001>
module attributes {stable_mosaic.version = 11 : i64} {
  func.func @_classifier_kernel(%arg0: i32, %arg1: memref<8x32xf32, #tpu.memory_space<vmem>>, %arg2: memref<32x32xf32, #tpu.memory_space<vmem>>, %arg3: memref<1x32xf32, #tpu.memory_space<vmem>>, %arg4: memref<32x16xf32, #tpu.memory_space<vmem>>, %arg5: memref<1x16xf32, #tpu.memory_space<vmem>>, %arg6: memref<16x8xf32, #tpu.memory_space<vmem>>, %arg7: memref<1x8xf32, #tpu.memory_space<vmem>>, %arg8: memref<8x128xf32, #tpu.memory_space<vmem>>, %arg9: memref<1x128xf32, #tpu.memory_space<vmem>>, %arg10: memref<8x4xf32, #tpu.memory_space<vmem>>) attributes {dimension_semantics = [#tpu.dimension_semantics<parallel>], iteration_bounds = array<i64: 2>, scalar_prefetch = 0 : i64, scratch_operands = 0 : i64, tpu.core_type = #tpu.core_type<tc>, window_params = [{transform_indices = @transform_0, window_bounds = array<i64: 8, 32>}, {pipeline_mode = #tpu.pipeline_mode<synchronous>, transform_indices = @transform_1, window_bounds = array<i64: 32, 32>}, {pipeline_mode = #tpu.pipeline_mode<synchronous>, transform_indices = @transform_2, window_bounds = array<i64: 1, 32>}, {pipeline_mode = #tpu.pipeline_mode<synchronous>, transform_indices = @transform_3, window_bounds = array<i64: 32, 16>}, {pipeline_mode = #tpu.pipeline_mode<synchronous>, transform_indices = @transform_4, window_bounds = array<i64: 1, 16>}, {pipeline_mode = #tpu.pipeline_mode<synchronous>, transform_indices = @transform_5, window_bounds = array<i64: 16, 8>}, {pipeline_mode = #tpu.pipeline_mode<synchronous>, transform_indices = @transform_6, window_bounds = array<i64: 1, 8>}, {pipeline_mode = #tpu.pipeline_mode<synchronous>, transform_indices = @transform_7, window_bounds = array<i64: 8, 128>}, {pipeline_mode = #tpu.pipeline_mode<synchronous>, transform_indices = @transform_8, window_bounds = array<i64: 1, 128>}, {transform_indices = @transform_9, window_bounds = array<i64: 8, 4>}]} {
    %c0 = arith.constant 0 : index
    %c0_0 = arith.constant 0 : index
    %0 = vector.load %arg1[%c0, %c0_0] : memref<8x32xf32, #tpu.memory_space<vmem>>, vector<8x32xf32>
    %c0_1 = arith.constant 0 : index
    %c0_2 = arith.constant 0 : index
    %1 = vector.load %arg2[%c0_1, %c0_2] : memref<32x32xf32, #tpu.memory_space<vmem>>, vector<32x32xf32>
    %cst = arith.constant dense<0.000000e+00> : vector<8x32xf32>
    %2 = tpu.matmul %0, %1, %cst {dimension_numbers = #tpu.dot_dimension_numbers<[1], [0], [0], [1], [0, 0, 1, 1], [], []>} : vector<8x32xf32>, vector<32x32xf32>, vector<8x32xf32> -> vector<8x32xf32>
    %c0_3 = arith.constant 0 : index
    %c0_4 = arith.constant 0 : index
    %3 = vector.load %arg3[%c0_3, %c0_4] : memref<1x32xf32, #tpu.memory_space<vmem>>, vector<1x32xf32>
    %4 = vector.broadcast %3 : vector<1x32xf32> to vector<8x32xf32>
    %5 = arith.addf %2, %4 : vector<8x32xf32>
    %cst_5 = arith.constant 0.000000e+00 : f32
    %6 = vector.broadcast %cst_5 : f32 to vector<8x32xf32>
    %7 = arith.maximumf %5, %6 : vector<8x32xf32>
    %c0_6 = arith.constant 0 : index
    %c0_7 = arith.constant 0 : index
    %8 = vector.load %arg4[%c0_6, %c0_7] : memref<32x16xf32, #tpu.memory_space<vmem>>, vector<32x16xf32>
    %cst_8 = arith.constant dense<0.000000e+00> : vector<8x16xf32>
    %9 = tpu.matmul %7, %8, %cst_8 {dimension_numbers = #tpu.dot_dimension_numbers<[1], [0], [0], [1], [0, 0, 1, 1], [], []>} : vector<8x32xf32>, vector<32x16xf32>, vector<8x16xf32> -> vector<8x16xf32>
    %c0_9 = arith.constant 0 : index
    %c0_10 = arith.constant 0 : index
    %10 = vector.load %arg5[%c0_9, %c0_10] : memref<1x16xf32, #tpu.memory_space<vmem>>, vector<1x16xf32>
    %11 = vector.broadcast %10 : vector<1x16xf32> to vector<8x16xf32>
    %12 = arith.addf %9, %11 : vector<8x16xf32>
    %cst_11 = arith.constant 0.000000e+00 : f32
    %13 = vector.broadcast %cst_11 : f32 to vector<8x16xf32>
    %14 = arith.maximumf %12, %13 : vector<8x16xf32>
    %c0_12 = arith.constant 0 : index
    %c0_13 = arith.constant 0 : index
    %15 = vector.load %arg6[%c0_12, %c0_13] : memref<16x8xf32, #tpu.memory_space<vmem>>, vector<16x8xf32>
    %cst_14 = arith.constant dense<0.000000e+00> : vector<8x8xf32>
    %16 = tpu.matmul %14, %15, %cst_14 {dimension_numbers = #tpu.dot_dimension_numbers<[1], [0], [0], [1], [0, 0, 1, 1], [], []>} : vector<8x16xf32>, vector<16x8xf32>, vector<8x8xf32> -> vector<8x8xf32>
    %c0_15 = arith.constant 0 : index
    %c0_16 = arith.constant 0 : index
    %17 = vector.load %arg7[%c0_15, %c0_16] : memref<1x8xf32, #tpu.memory_space<vmem>>, vector<1x8xf32>
    %18 = vector.broadcast %17 : vector<1x8xf32> to vector<8x8xf32>
    %19 = arith.addf %16, %18 : vector<8x8xf32>
    %cst_17 = arith.constant 0.000000e+00 : f32
    %20 = vector.broadcast %cst_17 : f32 to vector<8x8xf32>
    %21 = arith.maximumf %19, %20 : vector<8x8xf32>
    %c0_18 = arith.constant 0 : index
    %c0_19 = arith.constant 0 : index
    %22 = vector.load %arg8[%c0_18, %c0_19] : memref<8x128xf32, #tpu.memory_space<vmem>>, vector<8x128xf32>
    %cst_20 = arith.constant dense<0.000000e+00> : vector<8x128xf32>
    %23 = tpu.matmul %21, %22, %cst_20 {dimension_numbers = #tpu.dot_dimension_numbers<[1], [0], [0], [1], [0, 0, 1, 1], [], []>} : vector<8x8xf32>, vector<8x128xf32>, vector<8x128xf32> -> vector<8x128xf32>
    %c0_21 = arith.constant 0 : index
    %c0_22 = arith.constant 0 : index
    %24 = vector.load %arg9[%c0_21, %c0_22] : memref<1x128xf32, #tpu.memory_space<vmem>>, vector<1x128xf32>
    %25 = vector.broadcast %24 : vector<1x128xf32> to vector<8x128xf32>
    %26 = arith.addf %23, %25 : vector<8x128xf32>
    %cst_23 = arith.constant dense<0xFF800000> : vector<8xf32>
    %27 = vector.multi_reduction <maximumf>, %26, %cst_23 [1] : vector<8x128xf32> to vector<8xf32>
    %28 = vector.shape_cast %27 : vector<8xf32> to vector<8x1xf32>
    %29 = vector.broadcast %28 : vector<8x1xf32> to vector<8x128xf32>
    %30 = arith.subf %26, %29 : vector<8x128xf32>
    %31 = math.exp %30 : vector<8x128xf32>
    %cst_24 = arith.constant dense<0.000000e+00> : vector<8xf32>
    %32 = vector.multi_reduction <add>, %31, %cst_24 [1] : vector<8x128xf32> to vector<8xf32>
    %33 = vector.shape_cast %32 : vector<8xf32> to vector<8x1xf32>
    %34 = math.log %33 : vector<8x1xf32>
    %35 = vector.broadcast %34 : vector<8x1xf32> to vector<8x128xf32>
    %36 = arith.subf %30, %35 : vector<8x128xf32>
    %37 = vector.extract_strided_slice %36 {offsets = [0, 0], sizes = [8, 4], strides = [1, 1]} : vector<8x128xf32> to vector<8x4xf32>
    %c0_25 = arith.constant 0 : index
    %c0_26 = arith.constant 0 : index
    %38 = vector.load %arg10[%c0_25, %c0_26] : memref<8x4xf32, #tpu.memory_space<vmem>>, vector<8x4xf32>
    tpu.vector_store %arg10[%c0_25, %c0_26], %37 {strides = array<i32>} : memref<8x4xf32, #tpu.memory_space<vmem>>, vector<8x4xf32>,
    return
  }
  func.func @transform_0(%arg0: i32) -> (i32, i32) {
    %c0_i32 = arith.constant 0 : i32
    %c0_i32_0 = arith.constant 0 : i32
    return %arg0, %c0_i32 : i32, i32
  }
  func.func @transform_1(%arg0: i32) -> (i32, i32) {
    %c0_i32 = arith.constant 0 : i32
    %c0_i32_0 = arith.constant 0 : i32
    %c0_i32_1 = arith.constant 0 : i32
    return %c0_i32, %c0_i32_0 : i32, i32
  }
  func.func @transform_2(%arg0: i32) -> (i32, i32) {
    %c0_i32 = arith.constant 0 : i32
    %c0_i32_0 = arith.constant 0 : i32
    %c0_i32_1 = arith.constant 0 : i32
    return %c0_i32, %c0_i32_0 : i32, i32
  }
  func.func @transform_3(%arg0: i32) -> (i32, i32) {
    %c0_i32 = arith.constant 0 : i32
    %c0_i32_0 = arith.constant 0 : i32
    %c0_i32_1 = arith.constant 0 : i32
    return %c0_i32, %c0_i32_0 : i32, i32
  }
  func.func @transform_4(%arg0: i32) -> (i32, i32) {
    %c0_i32 = arith.constant 0 : i32
    %c0_i32_0 = arith.constant 0 : i32
    %c0_i32_1 = arith.constant 0 : i32
    return %c0_i32, %c0_i32_0 : i32, i32
  }
  func.func @transform_5(%arg0: i32) -> (i32, i32) {
    %c0_i32 = arith.constant 0 : i32
    %c0_i32_0 = arith.constant 0 : i32
    %c0_i32_1 = arith.constant 0 : i32
    return %c0_i32, %c0_i32_0 : i32, i32
  }
  func.func @transform_6(%arg0: i32) -> (i32, i32) {
    %c0_i32 = arith.constant 0 : i32
    %c0_i32_0 = arith.constant 0 : i32
    %c0_i32_1 = arith.constant 0 : i32
    return %c0_i32, %c0_i32_0 : i32, i32
  }
  func.func @transform_7(%arg0: i32) -> (i32, i32) {
    %c0_i32 = arith.constant 0 : i32
    %c0_i32_0 = arith.constant 0 : i32
    %c0_i32_1 = arith.constant 0 : i32
    return %c0_i32, %c0_i32_0 : i32, i32
  }
  func.func @transform_8(%arg0: i32) -> (i32, i32) {
    %c0_i32 = arith.constant 0 : i32
    %c0_i32_0 = arith.constant 0 : i32
    %c0_i32_1 = arith.constant 0 : i32
    return %c0_i32, %c0_i32_0 : i32, i32
  }
  func.func @transform_9(%arg0: i32) -> (i32, i32) {
    %c0_i32 = arith.constant 0 : i32
    %c0_i32_0 = arith.constant 0 : i32
    return %arg0, %c0_i32 : i32, i32
  }
}

</mosaic_0001>

<llo_original>
// kernel: classifier_forward.1
$region0: #{classifier_forward.1}
  #allocation0 [shape = 'u32[]', space=smem, size = 0x4, offset = 0x4, fixed_abs, tag = 'smem constant byte address 0x4 - core index']
  #allocation1 [shape = 'u32[144,128]{1,0:T(1,128)}', space=vmem, size = 0x12000, scoped, tag = 'internal scratch']
  %s0 = inlined_call_operand.vmem [shape: f32[10,32], index: 0, kind: input, shape index: {}]
  %s1 = inlined_call_operand.vmem [shape: f32[32,32], index: 1, kind: input, shape index: {}]
  %s2 = inlined_call_operand.vmem [shape: f32[1,32], index: 2, kind: input, shape index: {}]
  %s3 = inlined_call_operand.vmem [shape: f32[32,16], index: 3, kind: input, shape index: {}]
  %s4 = inlined_call_operand.vmem [shape: f32[1,16], index: 4, kind: input, shape index: {}]
  %s5 = inlined_call_operand.vmem [shape: f32[16,8], index: 5, kind: input, shape index: {}]
  %s6 = inlined_call_operand.vmem [shape: f32[1,8], index: 6, kind: input, shape index: {}]
  %s7 = inlined_call_operand.vmem [shape: f32[8,128], index: 7, kind: input, shape index: {}]
  %s8 = inlined_call_operand.vmem [shape: f32[1,128], index: 8, kind: input, shape index: {}]
  %s9 = inlined_call_operand.vmem [shape: f32[10,4], index: 9, kind: output, shape index: {}]
  %s10 = sld [smem:[#allocation0]]
  $region69: #{classifier_forward.1} parent=0
    _
  %s12 = ssub.s32 1, %s10
  %s13 = scalar_select 0, %s12, %s10
  loop: start=0, step=1, limit=4
  $region2: #{classifier_forward.1} parent=0 // loop_pre_header
    _
  $region3: #{classifier_forward.1} parent=0 // loop_header
    %s15 = sphi 0, %s19
    %p16 = scmp.ge.s32.totalorder %s15, 4
    %s25 = sphi 0, %s27
    %s28 = sphi 0, %s25
    %s29 = sphi 0, %s28
    %s45 = sphi 0, %s29
    %s49 = sphi 0, %s49
    %s51 = sphi 0, %s49
    %s52 = sphi 0, %s51
    %s66 = sphi 0, %s52
    %s70 = sphi 0, %s70
    %s72 = sphi 0, %s70
    %s73 = sphi 0, %s72
    %s87 = sphi 0, %s73
    %s91 = sphi 0, %s91
    %s93 = sphi 0, %s91
    %s94 = sphi 0, %s93
    %s108 = sphi 0, %s94
    %s112 = sphi 0, %s112
    %s114 = sphi 0, %s112
    %s115 = sphi 0, %s114
    %s129 = sphi 0, %s115
    %s133 = sphi 0, %s133
    %s135 = sphi 0, %s133
    %s136 = sphi 0, %s135
    %s150 = sphi 0, %s136
    %s154 = sphi 0, %s154
    %s156 = sphi 0, %s154
    %s157 = sphi 0, %s156
    %s171 = sphi 0, %s157
    %s175 = sphi 0, %s175
    %s177 = sphi 0, %s175
    %s178 = sphi 0, %s177
    %s192 = sphi 0, %s178
    %s196 = sphi 0, %s196
    %s198 = sphi 0, %s196
    %s199 = sphi 0, %s198
    %s213 = sphi 0, %s199
    %s219 = sphi 0, %s221
    %s222 = sphi 0, %s219
    %s223 = sphi 0, %s222
    %s239 = sphi 0, %s223
  $region4: #{classifier_forward.1} parent=0 // loop_header_branch
    %18 = sbr.rel (%p16) target = $region8
  $region5: #{classifier_forward.1} parent=0 // loop_body
    %s20 = ssub.s32 %s15, 1
    %s21 = ssub.s32 %s15, 2
    %s22 = sadd.s32 %s15, 1
    %s23 = ssub.s32 %s15, %s22
    %p24 = scmp.eq.s32.totalorder %s23, 0
    %s26 = sadd.s32 %s25, 1
    %s27 = scalar_select %p24, %s25, %s26
    %p30 = pneg %p24
    %p31 = scmp.eq.s32.totalorder %s15, 1
    %p32 = por %p30, %p31
    %p33 = scmp.ne.s32.totalorder %s25, %s28
    %p34 = scmp.eq.s32.totalorder %s15, 0
    %p35 = por %p33, %p34
    %p36 = scmp.ne.s32.totalorder %s25, %s28
    %p37 = scmp.eq.s32.totalorder %s20, 1
    %p38 = por %p36, %p37
    %p39 = scmp.ne.s32.totalorder %s28, %s29
    %p40 = scmp.eq.s32.totalorder %s20, 0
    %p41 = por %p39, %p40
    %p42 = scmp.ne.s32.totalorder %s28, %s29
    %p43 = scmp.eq.s32.totalorder %s21, 1
    %p44 = por %p42, %p43
    %p46 = scmp.ne.s32.totalorder %s29, %s45
    %p47 = scmp.eq.s32.totalorder %s21, 0
    %p48 = por %p46, %p47
    %s50 = sadd.s32 %s49, 1
    %p53 = scmp.eq.s32.totalorder %s15, 1
    %p54 = scmp.ne.s32.totalorder %s49, %s51
    %p55 = scmp.eq.s32.totalorder %s15, 0
    %p56 = por %p54, %p55
    %p57 = scmp.ne.s32.totalorder %s49, %s51
    %p58 = scmp.eq.s32.totalorder %s20, 1
    %p59 = por %p57, %p58
    %p60 = scmp.ne.s32.totalorder %s51, %s52
    %p61 = scmp.eq.s32.totalorder %s20, 0
    %p62 = por %p60, %p61
    %p63 = scmp.ne.s32.totalorder %s51, %s52
    %p64 = scmp.eq.s32.totalorder %s21, 1
    %p65 = por %p63, %p64
    %p67 = scmp.ne.s32.totalorder %s52, %s66
    %p68 = scmp.eq.s32.totalorder %s21, 0
    %p69 = por %p67, %p68
    %s71 = sadd.s32 %s70, 1
    %p74 = scmp.eq.s32.totalorder %s15, 1
    %p75 = scmp.ne.s32.totalorder %s70, %s72
    %p76 = scmp.eq.s32.totalorder %s15, 0
    %p77 = por %p75, %p76
    %p78 = scmp.ne.s32.totalorder %s70, %s72
    %p79 = scmp.eq.s32.totalorder %s20, 1
    %p80 = por %p78, %p79
    %p81 = scmp.ne.s32.totalorder %s72, %s73
    %p82 = scmp.eq.s32.totalorder %s20, 0
    %p83 = por %p81, %p82
    %p84 = scmp.ne.s32.totalorder %s72, %s73
    %p85 = scmp.eq.s32.totalorder %s21, 1
    %p86 = por %p84, %p85
    %p88 = scmp.ne.s32.totalorder %s73, %s87
    %p89 = scmp.eq.s32.totalorder %s21, 0
    %p90 = por %p88, %p89
    %s92 = sadd.s32 %s91, 1
    %p95 = scmp.eq.s32.totalorder %s15, 1
    %p96 = scmp.ne.s32.totalorder %s91, %s93
    %p97 = scmp.eq.s32.totalorder %s15, 0
    %p98 = por %p96, %p97
    %p99 = scmp.ne.s32.totalorder %s91, %s93
    %p100 = scmp.eq.s32.totalorder %s20, 1
    %p101 = por %p99, %p100
    %p102 = scmp.ne.s32.totalorder %s93, %s94
    %p103 = scmp.eq.s32.totalorder %s20, 0
    %p104 = por %p102, %p103
    %p105 = scmp.ne.s32.totalorder %s93, %s94
    %p106 = scmp.eq.s32.totalorder %s21, 1
    %p107 = por %p105, %p106
    %p109 = scmp.ne.s32.totalorder %s94, %s108
    %p110 = scmp.eq.s32.totalorder %s21, 0
    %p111 = por %p109, %p110
    %s113 = sadd.s32 %s112, 1
    %p116 = scmp.eq.s32.totalorder %s15, 1
    %p117 = scmp.ne.s32.totalorder %s112, %s114
    %p118 = scmp.eq.s32.totalorder %s15, 0
    %p119 = por %p117, %p118
    %p120 = scmp.ne.s32.totalorder %s112, %s114
    %p121 = scmp.eq.s32.totalorder %s20, 1
    %p122 = por %p120, %p121
    %p123 = scmp.ne.s32.totalorder %s114, %s115
    %p124 = scmp.eq.s32.totalorder %s20, 0
    %p125 = por %p123, %p124
    %p126 = scmp.ne.s32.totalorder %s114, %s115
    %p127 = scmp.eq.s32.totalorder %s21, 1
    %p128 = por %p126, %p127
    %p130 = scmp.ne.s32.totalorder %s115, %s129
    %p131 = scmp.eq.s32.totalorder %s21, 0
    %p132 = por %p130, %p131
    %s134 = sadd.s32 %s133, 1
    %p137 = scmp.eq.s32.totalorder %s15, 1
    %p138 = scmp.ne.s32.totalorder %s133, %s135
    %p139 = scmp.eq.s32.totalorder %s15, 0
    %p140 = por %p138, %p139
    %p141 = scmp.ne.s32.totalorder %s133, %s135
    %p142 = scmp.eq.s32.totalorder %s20, 1
    %p143 = por %p141, %p142
    %p144 = scmp.ne.s32.totalorder %s135, %s136
    %p145 = scmp.eq.s32.totalorder %s20, 0
    %p146 = por %p144, %p145
    %p147 = scmp.ne.s32.totalorder %s135, %s136
    %p148 = scmp.eq.s32.totalorder %s21, 1
    %p149 = por %p147, %p148
    %p151 = scmp.ne.s32.totalorder %s136, %s150
    %p152 = scmp.eq.s32.totalorder %s21, 0
    %p153 = por %p151, %p152
    %s155 = sadd.s32 %s154, 1
    %p158 = scmp.eq.s32.totalorder %s15, 1
    %p159 = scmp.ne.s32.totalorder %s154, %s156
    %p160 = scmp.eq.s32.totalorder %s15, 0
    %p161 = por %p159, %p160
    %p162 = scmp.ne.s32.totalorder %s154, %s156
    %p163 = scmp.eq.s32.totalorder %s20, 1
    %p164 = por %p162, %p163
    %p165 = scmp.ne.s32.totalorder %s156, %s157
    %p166 = scmp.eq.s32.totalorder %s20, 0
    %p167 = por %p165, %p166
    %p168 = scmp.ne.s32.totalorder %s156, %s157
    %p169 = scmp.eq.s32.totalorder %s21, 1
    %p170 = por %p168, %p169
    %p172 = scmp.ne.s32.totalorder %s157, %s171
    %p173 = scmp.eq.s32.totalorder %s21, 0
    %p174 = por %p172, %p173
    %s176 = sadd.s32 %s175, 1
    %p179 = scmp.eq.s32.totalorder %s15, 1
    %p180 = scmp.ne.s32.totalorder %s175, %s177
    %p181 = scmp.eq.s32.totalorder %s15, 0
    %p182 = por %p180, %p181
    %p183 = scmp.ne.s32.totalorder %s175, %s177
    %p184 = scmp.eq.s32.totalorder %s20, 1
    %p185 = por %p183, %p184
    %p186 = scmp.ne.s32.totalorder %s177, %s178
    %p187 = scmp.eq.s32.totalorder %s20, 0
    %p188 = por %p186, %p187
    %p189 = scmp.ne.s32.totalorder %s177, %s178
    %p190 = scmp.eq.s32.totalorder %s21, 1
    %p191 = por %p189, %p190
    %p193 = scmp.ne.s32.totalorder %s178, %s192
    %p194 = scmp.eq.s32.totalorder %s21, 0
    %p195 = por %p193, %p194
    %s197 = sadd.s32 %s196, 1
    %p200 = scmp.eq.s32.totalorder %s15, 1
    %p201 = scmp.ne.s32.totalorder %s196, %s198
    %p202 = scmp.eq.s32.totalorder %s15, 0
    %p203 = por %p201, %p202
    %p204 = scmp.ne.s32.totalorder %s196, %s198
    %p205 = scmp.eq.s32.totalorder %s20, 1
    %p206 = por %p204, %p205
    %p207 = scmp.ne.s32.totalorder %s198, %s199
    %p208 = scmp.eq.s32.totalorder %s20, 0
    %p209 = por %p207, %p208
    %p210 = scmp.ne.s32.totalorder %s198, %s199
    %p211 = scmp.eq.s32.totalorder %s21, 1
    %p212 = por %p210, %p211
    %p214 = scmp.ne.s32.totalorder %s199, %s213
    %p215 = scmp.eq.s32.totalorder %s21, 0
    %p216 = por %p214, %p215
    %s217 = ssub.s32 %s15, %s22
    %p218 = scmp.eq.s32.totalorder %s217, 0
    %s220 = sadd.s32 %s219, 1
    %s221 = scalar_select %p218, %s219, %s220
    %p224 = pneg %p218
    %p225 = scmp.eq.s32.totalorder %s15, 1
    %p226 = por %p224, %p225
    %p227 = scmp.ne.s32.totalorder %s219, %s222
    %p228 = scmp.eq.s32.totalorder %s15, 0
    %p229 = por %p227, %p228
    %p230 = scmp.ne.s32.totalorder %s219, %s222
    %p231 = scmp.eq.s32.totalorder %s20, 1
    %p232 = por %p230, %p231
    %p233 = scmp.ne.s32.totalorder %s222, %s223
    %p234 = scmp.eq.s32.totalorder %s20, 0
    %p235 = por %p233, %p234
    %p236 = scmp.ne.s32.totalorder %s222, %s223
    %p237 = scmp.eq.s32.totalorder %s21, 1
    %p238 = por %p236, %p237
    %p240 = scmp.ne.s32.totalorder %s223, %s239
    %p241 = scmp.eq.s32.totalorder %s21, 0
    %p242 = por %p240, %p241
    %p243 = scmp.le.s32.totalorder 1, %s15
    %p244 = scmp.lt.s32.totalorder %s15, 3
    %p245 = pnand %p243, %p244
    %p246 = pneg %p245
    // Predicated region
    $region9: #{classifier_forward.1} parent=5 // pred_check
      _
    $region10: #{classifier_forward.1} parent=5 // pred_check_branch
      %248 = sbr.rel (%p245) target = $region12
    $region11: #{classifier_forward.1} parent=5 // pred_region
      %s249 = ssub.s32 %s15, 1
      // Predicated region
      $region13: #{classifier_forward.1} parent=11 // pred_check
        %p250 = pneg %p62
      $region14: #{classifier_forward.1} parent=11 // pred_check_branch
        %252 = sbr.rel (%p250) target = $region16
      $region15: #{classifier_forward.1} parent=11 // pred_region
        _
      $region16: #{classifier_forward.1} parent=11 // pred_fallthru
        _
      // Predicated region
      $region17: #{classifier_forward.1} parent=11 // pred_check
        %p253 = pneg %p83
      $region18: #{classifier_forward.1} parent=11 // pred_check_branch
        %255 = sbr.rel (%p253) target = $region20
      $region19: #{classifier_forward.1} parent=11 // pred_region
        _
      $region20: #{classifier_forward.1} parent=11 // pred_fallthru
        _
      // Predicated region
      $region21: #{classifier_forward.1} parent=11 // pred_check
        %p256 = pneg %p104
      $region22: #{classifier_forward.1} parent=11 // pred_check_branch
        %258 = sbr.rel (%p256) target = $region24
      $region23: #{classifier_forward.1} parent=11 // pred_region
        _
      $region24: #{classifier_forward.1} parent=11 // pred_fallthru
        _
      // Predicated region
      $region25: #{classifier_forward.1} parent=11 // pred_check
        %p259 = pneg %p125
      $region26: #{classifier_forward.1} parent=11 // pred_check_branch
        %261 = sbr.rel (%p259) target = $region28
      $region27: #{classifier_forward.1} parent=11 // pred_region
        _
      $region28: #{classifier_forward.1} parent=11 // pred_fallthru
        _
      // Predicated region
      $region29: #{classifier_forward.1} parent=11 // pred_check
        %p262 = pneg %p146
      $region30: #{classifier_forward.1} parent=11 // pred_check_branch
        %264 = sbr.rel (%p262) target = $region32
      $region31: #{classifier_forward.1} parent=11 // pred_region
        _
      $region32: #{classifier_forward.1} parent=11 // pred_fallthru
        _
      // Predicated region
      $region33: #{classifier_forward.1} parent=11 // pred_check
        %p265 = pneg %p167
      $region34: #{classifier_forward.1} parent=11 // pred_check_branch
        %267 = sbr.rel (%p265) target = $region36
      $region35: #{classifier_forward.1} parent=11 // pred_region
        _
      $region36: #{classifier_forward.1} parent=11 // pred_fallthru
        _
      // Predicated region
      $region37: #{classifier_forward.1} parent=11 // pred_check
        %p268 = pneg %p188
      $region38: #{classifier_forward.1} parent=11 // pred_check_branch
        %270 = sbr.rel (%p268) target = $region40
      $region39: #{classifier_forward.1} parent=11 // pred_region
        _
      $region40: #{classifier_forward.1} parent=11 // pred_fallthru
        _
      // Predicated region
      $region41: #{classifier_forward.1} parent=11 // pred_check
        %p271 = pneg %p209
      $region42: #{classifier_forward.1} parent=11 // pred_check_branch
        %273 = sbr.rel (%p271) target = $region44
      $region43: #{classifier_forward.1} parent=11 // pred_region
        _
      $region44: #{classifier_forward.1} parent=11 // pred_fallthru
        _
    $region12: #{classifier_forward.1} parent=5 // pred_fallthru
      _
    %p274 = scmp.lt.s32.totalorder %s15, 2
    // Predicated region
    $region45: #{classifier_forward.1} parent=5 // pred_check
      %p275 = pneg %p274
    $region46: #{classifier_forward.1} parent=5 // pred_check_branch
      %277 = sbr.rel (%p275) target = $region48
    $region47: #{classifier_forward.1} parent=5 // pred_region
      // Predicated region
      $region49: #{classifier_forward.1} parent=47 // pred_check
        %p278 = pneg %p35
      $region50: #{classifier_forward.1} parent=47 // pred_check_branch
        %280 = sbr.rel (%p278) target = $region52
      $region51: #{classifier_forward.1} parent=47 // pred_region
        %p281 = scmp.lt.s32.totalorder %s15, 1
        %s282 = scalar_select %p281, %s15, 1
        %s283 = smul.addr %s282, 8
        %s284 = scalar_lea.vmem %s0, %s283
      $region52: #{classifier_forward.1} parent=47 // pred_fallthru
        _
    $region48: #{classifier_forward.1} parent=5 // pred_fallthru
      _
    %p285 = scmp.le.s32.totalorder 1, %s15
    %p286 = scmp.lt.s32.totalorder %s15, 3
    %p287 = pnand %p285, %p286
    %p288 = pneg %p287
    // Predicated region
    $region53: #{classifier_forward.1} parent=5 // pred_check
      _
    $region54: #{classifier_forward.1} parent=5 // pred_check_branch
      %290 = sbr.rel (%p287) target = $region56
    $region55: #{classifier_forward.1} parent=5 // pred_region
      %s291 = ssub.s32 %s15, 1
      %p292 = scmp.lt.s32.totalorder %s20, 1
      %s293 = scalar_select %p292, %s20, 1
      %s294 = smul.addr %s293, 8
      %s295 = scalar_lea.vmem %s0, %s294
      %p296 = pneg %p41
      %p297 = pneg %p38
      %p298 = pneg %p62
      %p299 = pneg %p59
      %p300 = pneg %p83
      %p301 = pneg %p80
      %p302 = pneg %p104
      %p303 = pneg %p101
      %p304 = pneg %p125
      %p305 = pneg %p122
      %p306 = pneg %p146
      %p307 = pneg %p143
      %p308 = pneg %p167
      %p309 = pneg %p164
      %p310 = pneg %p188
      %p311 = pneg %p185
      %p312 = pneg %p209
      %p313 = pneg %p206
      %p314 = pneg %p235
      %p315 = pneg %p232
      %p316 = scmp.lt.s32.totalorder %s20, 1
      %s317 = scalar_select %p316, %s20, 1
      %s318 = smul.addr %s317, 8
      %s319 = scalar_lea.vmem %s9, %s318
      %p320 = scmp.lt.s32.totalorder %s20, 1
      %s321 = scalar_select %p320, %s20, 1
      %s322 = smul.addr %s321, 8
      %s323 = scalar_lea.vmem %s0, %s322
      %p324 = scmp.lt.s32.totalorder %s20, 1
      %s325 = scalar_select %p324, %s20, 1
      %s326 = smul.addr %s325, 8
      %s327 = scalar_lea.vmem %s9, %s326
      %v328 = vld [vmem:[%s323] sm:$0xff]
      %v329 = vld [vmem:[%s1] sm:$0xff]
      %v330 = vld [vmem:[%s1 + $0x8] sm:$0xff]
      %v331 = vld [vmem:[%s1 + $0x10] sm:$0xff]
      %v332 = vld [vmem:[%s1 + $0x18] sm:$0xff]
      %v333 = vld [vmem:[%s2] sm:$0x1]
      %v335 = vlaneseq
      %v336 = vshrl.u32 %v335, 7
      %v337 = vsub.s32 0, %v336
      %v338 = vrot.slane %v333, %v337
      %vm340 = vcmask 261120
      %v342 = vsel %vm340, %v328, 0
      %344 = vmatprep.subr.mxu0 0.0
      %345 = vmatpush1.msra.mxu0 0.0
      %346 = vmatprep.subr.mxu0 0.0
      %347 = vmatpush1.msra.mxu0 0.0
      %348 = vmatprep.subr.mxu0 0.0
      %349 = vmatpush1.msra.mxu0 0.0
      %350 = vmatprep.subr.mxu0 0.0
      %351 = vmatpush1.msra.mxu0 0.0
      %352 = vmatprep.subr.mxu0 0.0
      %353 = vmatpush1.msra.mxu0 0.0
      %354 = vmatprep.subr.mxu0 0.0
      %355 = vmatpush1.msra.mxu0 0.0
      %356 = vmatprep.subr.mxu0 0.0
      %357 = vmatpush1.msra.mxu0 0.0
      %358 = vmatprep.subr.mxu0 0.0
      %359 = vmatpush1.msra.mxu0 0.0
      %360 = vmatprep.subr.mxu0 0.0
      %361 = vmatpush1.msra.mxu0 0.0
      %362 = vmatprep.subr.mxu0 0.0
      %363 = vmatpush1.msra.mxu0 0.0
      %364 = vmatprep.subr.mxu0 0.0
      %365 = vmatpush1.msra.mxu0 0.0
      %366 = vmatprep.subr.mxu0 0.0
      %367 = vmatpush1.msra.mxu0 0.0
      %368 = vmatprep.subr.mxu0 0.0
      %369 = vmatpush1.msra.mxu0 %v332
      %370 = vmatprep.subr.mxu0 0.0
      %371 = vmatpush1.msra.mxu0 %v331
      %372 = vmatprep.subr.mxu0 0.0
      %373 = vmatpush1.msra.mxu0 %v330
      %374 = vmatprep.subr.mxu0 0.0
      %375 = vmatpush1.msra.mxu0 %v329
      %376 = vmatprep.subr.mxu0 0.0
      %377 = vmatpush2.msra.mxu0 0.0
      %378 = vmatprep.subr.mxu0 0.0
      %379 = vmatpush2.msra.mxu0 0.0
      %380 = vmatprep.subr.mxu0 0.0
      %381 = vmatpush2.msra.mxu0 0.0
      %382 = vmatprep.subr.mxu0 0.0
      %383 = vmatpush2.msra.mxu0 0.0
      %384 = vmatprep.subr.mxu0 0.0
      %385 = vmatpush2.msra.mxu0 0.0
      %386 = vmatprep.subr.mxu0 0.0
      %387 = vmatpush2.msra.mxu0 0.0
      %388 = vmatprep.subr.mxu0 0.0
      %389 = vmatpush2.msra.mxu0 0.0
      %390 = vmatprep.subr.mxu0 0.0
      %391 = vmatpush2.msra.mxu0 0.0
      %392 = vmatprep.subr.mxu0 0.0
      %393 = vmatpush2.msra.mxu0 0.0
      %394 = vmatprep.subr.mxu0 0.0
      %395 = vmatpush2.msra.mxu0 0.0
      %396 = vmatprep.subr.mxu0 0.0
      %397 = vmatpush2.msra.mxu0 0.0
      %398 = vmatprep.subr.mxu0 0.0
      %399 = vmatpush2.msra.mxu0 0.0
      %400 = vmatprep.subr.mxu0 0.0
      %401 = vmatpush2.msra.mxu0 0.0
      %402 = vmatprep.subr.mxu0 0.0
      %403 = vmatpush2.msra.mxu0 0.0
      %404 = vmatprep.subr.mxu0 0.0
      %405 = vmatpush2.msra.mxu0 0.0
      %406 = vmatprep.subr.mxu0 0.0
      %407 = vmatpush2.msra.mxu0 0.0
      %408 = vmatprep.mubr.f32.mxu0 0.0
      %409 = vmatmul.mubr.f32.gmra.mxu0 %v342
      %v410 = vpop.f32.mrf.mxu0
      %v411 = vadd.f32 %v338, %v410
      %v412 = vpop.f32.mrf.mxu0
      %413 = vdwg.mxu0
      %v414 = vmax.f32 %v411, 0.0
      %v415 = vld [vmem:[%s3] sm:$0xff]
      %v416 = vld [vmem:[%s3 + $0x8] sm:$0xff]
      %v417 = vld [vmem:[%s3 + $0x10] sm:$0xff]
      %v418 = vld [vmem:[%s3 + $0x18] sm:$0xff]
      %v419 = vld [vmem:[%s4] sm:$0x1]
      %v421 = vlaneseq
      %v422 = vshrl.u32 %v421, 7
      %v423 = vsub.s32 0, %v422
      %v424 = vrot.slane %v419, %v423
      %v427 = vsel %vm340, %v414, 0
      %429 = vmatprep.subr.mxu0 0.0
      %430 = vmatpush1.msra.mxu0 0.0
      %431 = vmatprep.subr.mxu0 0.0
      %432 = vmatpush1.msra.mxu0 0.0
      %433 = vmatprep.subr.mxu0 0.0
      %434 = vmatpush1.msra.mxu0 0.0
      %435 = vmatprep.subr.mxu0 0.0
      %436 = vmatpush1.msra.mxu0 0.0
      %437 = vmatprep.subr.mxu0 0.0
      %438 = vmatpush1.msra.mxu0 0.0
      %439 = vmatprep.subr.mxu0 0.0
      %440 = vmatpush1.msra.mxu0 0.0
      %441 = vmatprep.subr.mxu0 0.0
      %442 = vmatpush1.msra.mxu0 0.0
      %443 = vmatprep.subr.mxu0 0.0
      %444 = vmatpush1.msra.mxu0 0.0
      %445 = vmatprep.subr.mxu0 0.0
      %446 = vmatpush1.msra.mxu0 0.0
      %447 = vmatprep.subr.mxu0 0.0
      %448 = vmatpush1.msra.mxu0 0.0
      %449 = vmatprep.subr.mxu0 0.0
      %450 = vmatpush1.msra.mxu0 0.0
      %451 = vmatprep.subr.mxu0 0.0
      %452 = vmatpush1.msra.mxu0 0.0
      %453 = vmatprep.subr.mxu0 0.0
      %454 = vmatpush1.msra.mxu0 %v418
      %455 = vmatprep.subr.mxu0 0.0
      %456 = vmatpush1.msra.mxu0 %v417
      %457 = vmatprep.subr.mxu0 0.0
      %458 = vmatpush1.msra.mxu0 %v416
      %459 = vmatprep.subr.mxu0 0.0
      %460 = vmatpush1.msra.mxu0 %v415
      %461 = vmatprep.subr.mxu0 0.0
      %462 = vmatpush2.msra.mxu0 0.0
      %463 = vmatprep.subr.mxu0 0.0
      %464 = vmatpush2.msra.mxu0 0.0
      %465 = vmatprep.subr.mxu0 0.0
      %466 = vmatpush2.msra.mxu0 0.0
      %467 = vmatprep.subr.mxu0 0.0
      %468 = vmatpush2.msra.mxu0 0.0
      %469 = vmatprep.subr.mxu0 0.0
      %470 = vmatpush2.msra.mxu0 0.0
      %471 = vmatprep.subr.mxu0 0.0
      %472 = vmatpush2.msra.mxu0 0.0
      %473 = vmatprep.subr.mxu0 0.0
      %474 = vmatpush2.msra.mxu0 0.0
      %475 = vmatprep.subr.mxu0 0.0
      %476 = vmatpush2.msra.mxu0 0.0
      %477 = vmatprep.subr.mxu0 0.0
      %478 = vmatpush2.msra.mxu0 0.0
      %479 = vmatprep.subr.mxu0 0.0
      %480 = vmatpush2.msra.mxu0 0.0
      %481 = vmatprep.subr.mxu0 0.0
      %482 = vmatpush2.msra.mxu0 0.0
      %483 = vmatprep.subr.mxu0 0.0
      %484 = vmatpush2.msra.mxu0 0.0
      %485 = vmatprep.subr.mxu0 0.0
      %486 = vmatpush2.msra.mxu0 0.0
      %487 = vmatprep.subr.mxu0 0.0
      %488 = vmatpush2.msra.mxu0 0.0
      %489 = vmatprep.subr.mxu0 0.0
      %490 = vmatpush2.msra.mxu0 0.0
      %491 = vmatprep.subr.mxu0 0.0
      %492 = vmatpush2.msra.mxu0 0.0
      %493 = vmatprep.mubr.f32.mxu0 0.0
      %494 = vmatmul.mubr.f32.gmra.mxu0 %v427
      %v495 = vpop.f32.mrf.mxu0
      %v496 = vadd.f32 %v424, %v495
      %v497 = vpop.f32.mrf.mxu0
      %498 = vdwg.mxu0
      %v499 = vmax.f32 %v496, 0.0
      %v500 = vld [vmem:[%s5] sm:$0xff]
      %v501 = vld [vmem:[%s5 + $0x8] sm:$0xff]
      %v502 = vld [vmem:[%s6] sm:$0x1]
      %v504 = vlaneseq
      %v505 = vshrl.u32 %v504, 7
      %v506 = vsub.s32 0, %v505
      %v507 = vrot.slane %v502, %v506
      %vm509 = vcmask 130048
      %v511 = vsel %vm509, %v499, 0
      %513 = vmatprep.subr.mxu0 0.0
      %514 = vmatpush1.msra.mxu0 0.0
      %515 = vmatprep.subr.mxu0 0.0
      %516 = vmatpush1.msra.mxu0 0.0
      %517 = vmatprep.subr.mxu0 0.0
      %518 = vmatpush1.msra.mxu0 0.0
      %519 = vmatprep.subr.mxu0 0.0
      %520 = vmatpush1.msra.mxu0 0.0
      %521 = vmatprep.subr.mxu0 0.0
      %522 = vmatpush1.msra.mxu0 0.0
      %523 = vmatprep.subr.mxu0 0.0
      %524 = vmatpush1.msra.mxu0 0.0
      %525 = vmatprep.subr.mxu0 0.0
      %526 = vmatpush1.msra.mxu0 0.0
      %527 = vmatprep.subr.mxu0 0.0
      %528 = vmatpush1.msra.mxu0 0.0
      %529 = vmatprep.subr.mxu0 0.0
      %530 = vmatpush1.msra.mxu0 0.0
      %531 = vmatprep.subr.mxu0 0.0
      %532 = vmatpush1.msra.mxu0 0.0
      %533 = vmatprep.subr.mxu0 0.0
      %534 = vmatpush1.msra.mxu0 0.0
      %535 = vmatprep.subr.mxu0 0.0
      %536 = vmatpush1.msra.mxu0 0.0
      %537 = vmatprep.subr.mxu0 0.0
      %538 = vmatpush1.msra.mxu0 0.0
      %539 = vmatprep.subr.mxu0 0.0
      %540 = vmatpush1.msra.mxu0 0.0
      %541 = vmatprep.subr.mxu0 0.0
      %542 = vmatpush1.msra.mxu0 %v501
      %543 = vmatprep.subr.mxu0 0.0
      %544 = vmatpush1.msra.mxu0 %v500
      %545 = vmatprep.subr.mxu0 0.0
      %546 = vmatpush2.msra.mxu0 0.0
      %547 = vmatprep.subr.mxu0 0.0
      %548 = vmatpush2.msra.mxu0 0.0
      %549 = vmatprep.subr.mxu0 0.0
      %550 = vmatpush2.msra.mxu0 0.0
      %551 = vmatprep.subr.mxu0 0.0
      %552 = vmatpush2.msra.mxu0 0.0
      %553 = vmatprep.subr.mxu0 0.0
      %554 = vmatpush2.msra.mxu0 0.0
      %555 = vmatprep.subr.mxu0 0.0
      %556 = vmatpush2.msra.mxu0 0.0
      %557 = vmatprep.subr.mxu0 0.0
      %558 = vmatpush2.msra.mxu0 0.0
      %559 = vmatprep.subr.mxu0 0.0
      %560 = vmatpush2.msra.mxu0 0.0
      %561 = vmatprep.subr.mxu0 0.0
      %562 = vmatpush2.msra.mxu0 0.0
      %563 = vmatprep.subr.mxu0 0.0
      %564 = vmatpush2.msra.mxu0 0.0
      %565 = vmatprep.subr.mxu0 0.0
      %566 = vmatpush2.msra.mxu0 0.0
      %567 = vmatprep.subr.mxu0 0.0
      %568 = vmatpush2.msra.mxu0 0.0
      %569 = vmatprep.subr.mxu0 0.0
      %570 = vmatpush2.msra.mxu0 0.0
      %571 = vmatprep.subr.mxu0 0.0
      %572 = vmatpush2.msra.mxu0 0.0
      %573 = vmatprep.subr.mxu0 0.0
      %574 = vmatpush2.msra.mxu0 0.0
      %575 = vmatprep.subr.mxu0 0.0
      %576 = vmatpush2.msra.mxu0 0.0
      %577 = vmatprep.mubr.f32.mxu0 0.0
      %578 = vmatmul.mubr.f32.gmra.mxu0 %v511
      %v579 = vpop.f32.mrf.mxu0
      %v580 = vadd.f32 %v507, %v579
      %v581 = vpop.f32.mrf.mxu0
      %582 = vdwg.mxu0
      %v583 = vmax.f32 %v580, 0.0
      %v584 = vld [vmem:[%s7] sm:$0xff]
      %v585 = vld [vmem:[%s8] sm:$0x1]
      %v587 = vlaneseq
      %v588 = vshrl.u32 %v587, 7
      %v589 = vsub.s32 0, %v588
      %v590 = vrot.slane %v585, %v589
      %vm592 = vcmask 64512
      %v594 = vsel %vm592, %v583, 0
      %596 = vmatprep.subr.mxu0 0.0
      %597 = vmatpush1.msra.mxu0 0.0
      %598 = vmatprep.subr.mxu0 0.0
      %599 = vmatpush1.msra.mxu0 0.0
      %600 = vmatprep.subr.mxu0 0.0
      %601 = vmatpush1.msra.mxu0 0.0
      %602 = vmatprep.subr.mxu0 0.0
      %603 = vmatpush1.msra.mxu0 0.0
      %604 = vmatprep.subr.mxu0 0.0
      %605 = vmatpush1.msra.mxu0 0.0
      %606 = vmatprep.subr.mxu0 0.0
      %607 = vmatpush1.msra.mxu0 0.0
      %608 = vmatprep.subr.mxu0 0.0
      %609 = vmatpush1.msra.mxu0 0.0
      %610 = vmatprep.subr.mxu0 0.0
      %611 = vmatpush1.msra.mxu0 0.0
      %612 = vmatprep.subr.mxu0 0.0
      %613 = vmatpush1.msra.mxu0 0.0
      %614 = vmatprep.subr.mxu0 0.0
      %615 = vmatpush1.msra.mxu0 0.0
      %616 = vmatprep.subr.mxu0 0.0
      %617 = vmatpush1.msra.mxu0 0.0
      %618 = vmatprep.subr.mxu0 0.0
      %619 = vmatpush1.msra.mxu0 0.0
      %620 = vmatprep.subr.mxu0 0.0
      %621 = vmatpush1.msra.mxu0 0.0
      %622 = vmatprep.subr.mxu0 0.0
      %623 = vmatpush1.msra.mxu0 0.0
      %624 = vmatprep.subr.mxu0 0.0
      %625 = vmatpush1.msra.mxu0 0.0
      %626 = vmatprep.subr.mxu0 0.0
      %627 = vmatpush1.msra.mxu0 %v584
      %628 = vmatprep.subr.mxu0 0.0
      %629 = vmatpush2.msra.mxu0 0.0
      %630 = vmatprep.subr.mxu0 0.0
      %631 = vmatpush2.msra.mxu0 0.0
      %632 = vmatprep.subr.mxu0 0.0
      %633 = vmatpush2.msra.mxu0 0.0
      %634 = vmatprep.subr.mxu0 0.0
      %635 = vmatpush2.msra.mxu0 0.0
      %636 = vmatprep.subr.mxu0 0.0
      %637 = vmatpush2.msra.mxu0 0.0
      %638 = vmatprep.subr.mxu0 0.0
      %639 = vmatpush2.msra.mxu0 0.0
      %640 = vmatprep.subr.mxu0 0.0
      %641 = vmatpush2.msra.mxu0 0.0
      %642 = vmatprep.subr.mxu0 0.0
      %643 = vmatpush2.msra.mxu0 0.0
      %644 = vmatprep.subr.mxu0 0.0
      %645 = vmatpush2.msra.mxu0 0.0
      %646 = vmatprep.subr.mxu0 0.0
      %647 = vmatpush2.msra.mxu0 0.0
      %648 = vmatprep.subr.mxu0 0.0
      %649 = vmatpush2.msra.mxu0 0.0
      %650 = vmatprep.subr.mxu0 0.0
      %651 = vmatpush2.msra.mxu0 0.0
      %652 = vmatprep.subr.mxu0 0.0
      %653 = vmatpush2.msra.mxu0 0.0
      %654 = vmatprep.subr.mxu0 0.0
      %655 = vmatpush2.msra.mxu0 0.0
      %656 = vmatprep.subr.mxu0 0.0
      %657 = vmatpush2.msra.mxu0 0.0
      %658 = vmatprep.subr.mxu0 0.0
      %659 = vmatpush2.msra.mxu0 0.0
      %660 = vmatprep.mubr.f32.mxu0 0.0
      %661 = vmatmul.mubr.f32.gmra.mxu0 %v594
      %v662 = vpop.f32.mrf.mxu0
      %v663 = vadd.f32 %v590, %v662
      %v664 = vpop.f32.mrf.mxu0
      %665 = vdwg.mxu0
      %666 = vmax.xlane.f32.xlu0 %v663
      %v667 = vpop.xlane.xlu0 %666
      %v668 = vsub.f32 %v663, %v667
      %v669 = vmul.f32 %v668, 1.442695
      %v670 = vpow.pop %v669
      %671 = vadd.xlane.f32.xlu0 %v670
      %v672 = vpop.xlane.xlu0 %671
      %v673 = vlog2.pop %v672
      %v674 = vmul.f32 %v673, 0.6931472
      %v675 = vsub.f32 %v668, %v674
      %vm676 = vcmask 31744
      %677 = vst.msk [vmem:[%s327] sm:$0xff] %vm676, %v675
      %p678 = scmp.lt.s32.totalorder %s20, 1
      %s679 = scalar_select %p678, %s20, 1
      %s680 = smul.addr %s679, 8
      %s681 = scalar_lea.vmem %s9, %s680
      // Predicated region
      $region57: #{classifier_forward.1} parent=55 // pred_check
        %p682 = pneg %p232
      $region58: #{classifier_forward.1} parent=55 // pred_check_branch
        %684 = sbr.rel (%p682) target = $region60
      $region59: #{classifier_forward.1} parent=55 // pred_region
        _
      $region60: #{classifier_forward.1} parent=55 // pred_fallthru
        _
    $region56: #{classifier_forward.1} parent=5 // pred_fallthru
      _
    %p685 = scmp.le.s32.totalorder 2, %s15
    // Predicated region
    $region61: #{classifier_forward.1} parent=5 // pred_check
      %p686 = pneg %p685
    $region62: #{classifier_forward.1} parent=5 // pred_check_branch
      %688 = sbr.rel (%p686) target = $region64
    $region63: #{classifier_forward.1} parent=5 // pred_region
      %s689 = ssub.s32 %s15, 2
      // Predicated region
      $region65: #{classifier_forward.1} parent=63 // pred_check
        %p690 = pneg %p238
      $region66: #{classifier_forward.1} parent=63 // pred_check_branch
        %692 = sbr.rel (%p690) target = $region68
      $region67: #{classifier_forward.1} parent=63 // pred_region
        %p693 = scmp.lt.s32.totalorder %s21, 1
        %s694 = scalar_select %p693, %s21, 1
        %s695 = smul.addr %s694, 8
        %s696 = scalar_lea.vmem %s9, %s695
      $region68: #{classifier_forward.1} parent=63 // pred_fallthru
        _
    $region64: #{classifier_forward.1} parent=5 // pred_fallthru
      _
  $region6: #{classifier_forward.1} parent=0 // loop_footer
    %s19 = sadd.s32 1, %s15
  $region7: #{classifier_forward.1} parent=0 // loop_footer_branch
    %14 = sbr.rel target = $region3
  $region8: #{classifier_forward.1} parent=0 // loop_exit
    _

</llo_original>
